<compile_context>
chip_gen: v6e
topology: v6e:2x2x1
jax: 0.10.0
libtpu: 0.0.40
codegen_flags: <defaults>
</compile_context>

<pallas_src>
import jax
import jax.numpy as jnp
from jax.experimental import pallas as pl
from jax.experimental.pallas import tpu as pltpu

LANE = 128
SUBLANE = 8
MAX_BATCH_TILE = 256  # >= v6e/v7x MXU rows; amortizes per-step overhead
NEG_BIG = -1e30       # finite "masked out" logit; exp() underflows to exactly 0


def _round_up(x, m):
    return (x + m - 1) // m * m


def _actor_kernel(x_ref, w1_ref, b1_ref, w2_ref, b2_ref, w3_ref, b3_ref, pi_ref):
    # bf16 matmul operands, f32 MXU accumulation, f32 elementwise epilogue.
    x = x_ref[...]                                                   # (TB, D) bf16

    h1 = jnp.dot(x, w1_ref[...], preferred_element_type=jnp.float32) + b1_ref[...]
    h1 = jnp.maximum(h1, 0.0)

    h2 = jnp.dot(h1.astype(jnp.bfloat16), w2_ref[...],
                 preferred_element_type=jnp.float32) + b2_ref[...]
    h2 = jnp.maximum(h2, 0.0)

    logits = jnp.dot(h2.astype(jnp.bfloat16), w3_ref[...],
                     preferred_element_type=jnp.float32) + b3_ref[...]

    # Padded action columns carry a -1e30 bias -> exp() underflows to 0, so
    # they are excluded from the max/sum and the softmax over the real columns
    # is unchanged.  Exact f32 divide keeps sum(pi) == 1 to f32 precision.
    m = jnp.max(logits, axis=1, keepdims=True)
    e = jnp.exp(logits - m)
    denom = jnp.sum(e, axis=1, keepdims=True)
    pi_ref[...] = (e / denom).astype(pi_ref.dtype)


@jax.jit
def _actor_forward_padded(x, w1, b1, w2, b2, w3, b3):
    """x: (B, input_dims) f32.  Returns (B_pad, n_actions_pad) f32 softmax."""
    batch, input_dims = x.shape
    fc1_dims = w1.shape[1]
    fc2_dims = w2.shape[1]
    n_pad = w3.shape[1]                       # lane-padded action width (>=128)

    # Batch tile: multiple of 8 sublanes, capped at MAX_BATCH_TILE.
    tb = min(MAX_BATCH_TILE, _round_up(batch, SUBLANE))
    padded_b = _round_up(batch, tb)
    if padded_b != batch:
        x = jnp.pad(x, ((0, padded_b - batch), (0, 0)))
    xb = x.astype(jnp.bfloat16)

    grid = (padded_b // tb,)

    pi = pl.pallas_call(
        _actor_kernel,
        out_shape=jax.ShapeDtypeStruct((padded_b, n_pad), jnp.float32),
        grid=grid,
        in_specs=[
            # activations: tiled over the batch grid axis
            pl.BlockSpec((tb, input_dims), lambda i: (i, 0)),
            # weights/biases: same block for every i -> DMA'd once, VMEM-resident
            pl.BlockSpec((input_dims, fc1_dims), lambda i: (0, 0)),
            pl.BlockSpec((1, fc1_dims), lambda i: (0, 0)),
            pl.BlockSpec((fc1_dims, fc2_dims), lambda i: (0, 0)),
            pl.BlockSpec((1, fc2_dims), lambda i: (0, 0)),
            pl.BlockSpec((fc2_dims, n_pad), lambda i: (0, 0)),
            pl.BlockSpec((1, n_pad), lambda i: (0, 0)),
        ],
        out_specs=pl.BlockSpec((tb, n_pad), lambda i: (i, 0)),
        compiler_params=pltpu.CompilerParams(
            dimension_semantics=("parallel",),
        ),
    )(xb, w1, b1, w2, b2, w3, b3)
    return pi


def prepare_actor_params(w1, b1, w2, b2, w3, b3):
    """One-time parameter prep: bf16 matmul weights, f32 biases, lane-padded head."""
    n_actions = w3.shape[1]
    n_pad = _round_up(max(n_actions, LANE), LANE)
    w3_pad = jnp.zeros((w3.shape[0], n_pad), jnp.float32).at[:, :n_actions].set(w3)
    b3_pad = (jnp.full((1, n_pad), NEG_BIG, jnp.float32)
              .at[:, :n_actions].set(jnp.reshape(b3, (1, -1))))
    return {
        "w1": w1.astype(jnp.bfloat16), "b1": jnp.reshape(b1, (1, -1)).astype(jnp.float32),
        "w2": w2.astype(jnp.bfloat16), "b2": jnp.reshape(b2, (1, -1)).astype(jnp.float32),
        "w3": w3_pad.astype(jnp.bfloat16), "b3": b3_pad,
        "n_actions": n_actions,
    }


def actor_forward(state, params):
    """state: (B, *feature_dims) -> softmax policy (B, n_actions)."""
    batch = state.shape[0]
    x = state.reshape(batch, -1).astype(jnp.float32)   # torch .flatten(start_dim=1)
    pi_pad = _actor_forward_padded(
        x, params["w1"], params["b1"], params["w2"], params["b2"],
        params["w3"], params["b3"])
    return pi_pad[:batch, :params["n_actions"]]


def init_linear(key, fan_in, fan_out):
    """Matches torch.nn.Linear default init U(-1/sqrt(fan_in), +1/sqrt(fan_in))."""
    kw, kb = jax.random.split(key)
    bound = 1.0 / jnp.sqrt(jnp.float32(fan_in))
    w = jax.random.uniform(kw, (fan_in, fan_out), jnp.float32, -bound, bound)
    b = jax.random.uniform(kb, (1, fan_out), jnp.float32, -bound, bound)
    return w, b


if __name__ == "__main__":
    # state (B, C, F) -> flatten -> (B, input_dims)
    batch, C, F_ = 8, 4, 16
    input_dims = C * F_          # 64
    fc1_dims, fc2_dims = 128, 128
    n_actions = 5

    key = jax.random.PRNGKey(0)
    k_state, k1, k2, k3 = jax.random.split(key, 4)

    state = jax.random.normal(k_state, (batch, C, F_), jnp.float32)
    w1, b1 = init_linear(k1, input_dims, fc1_dims)
    w2, b2 = init_linear(k2, fc1_dims, fc2_dims)
    w3, b3 = init_linear(k3, fc2_dims, n_actions)

    params = prepare_actor_params(w1, b1, w2, b2, w3, b3)

    pi = actor_forward(state, params)
    pi = jax.block_until_ready(pi)

    # Reference in plain f32 JAX (same math as the PyTorch module).
    x = state.reshape(batch, -1)
    h1 = jnp.maximum(x @ w1 + b1, 0.0)
    h2 = jnp.maximum(h1 @ w2 + b2, 0.0)
    ref = jax.nn.softmax(h2 @ w3 + b3, axis=1)

    assert pi.shape == (batch, n_actions)
    # bf16 matmul operands (f32 accum) -> slightly looser tolerance vs f32 ref.
    assert jnp.allclose(pi, ref, atol=2e-2, rtol=2e-2)
    assert jnp.allclose(jnp.sum(pi, axis=1), 1.0, atol=1e-3)

    print("KERNEL_OK")
</pallas_src>

<mosaic_0001>
module attributes {stable_mosaic.version = 11 : i64} {
  func.func @_actor_kernel(%arg0: i32, %arg1: memref<8x64xbf16, #tpu.memory_space<vmem>>, %arg2: memref<64x128xbf16, #tpu.memory_space<vmem>>, %arg3: memref<1x128xf32, #tpu.memory_space<vmem>>, %arg4: memref<128x128xbf16, #tpu.memory_space<vmem>>, %arg5: memref<1x128xf32, #tpu.memory_space<vmem>>, %arg6: memref<128x128xbf16, #tpu.memory_space<vmem>>, %arg7: memref<1x128xf32, #tpu.memory_space<vmem>>, %arg8: memref<8x128xf32, #tpu.memory_space<vmem>>) attributes {dimension_semantics = [#tpu.dimension_semantics<parallel>], iteration_bounds = array<i64: 1>, scalar_prefetch = 0 : i64, scratch_operands = 0 : i64, tpu.core_type = #tpu.core_type<tc>, window_params = [{transform_indices = @transform_0, window_bounds = array<i64: 8, 64>}, {pipeline_mode = #tpu.pipeline_mode<synchronous>, transform_indices = @transform_1, window_bounds = array<i64: 64, 128>}, {pipeline_mode = #tpu.pipeline_mode<synchronous>, transform_indices = @transform_2, window_bounds = array<i64: 1, 128>}, {pipeline_mode = #tpu.pipeline_mode<synchronous>, transform_indices = @transform_3, window_bounds = array<i64: 128, 128>}, {pipeline_mode = #tpu.pipeline_mode<synchronous>, transform_indices = @transform_4, window_bounds = array<i64: 1, 128>}, {pipeline_mode = #tpu.pipeline_mode<synchronous>, transform_indices = @transform_5, window_bounds = array<i64: 128, 128>}, {pipeline_mode = #tpu.pipeline_mode<synchronous>, transform_indices = @transform_6, window_bounds = array<i64: 1, 128>}, {transform_indices = @transform_7, window_bounds = array<i64: 8, 128>}]} {
    %c0 = arith.constant 0 : index
    %c0_0 = arith.constant 0 : index
    %0 = vector.load %arg1[%c0, %c0_0] : memref<8x64xbf16, #tpu.memory_space<vmem>>, vector<8x64xbf16>
    %c0_1 = arith.constant 0 : index
    %c0_2 = arith.constant 0 : index
    %1 = vector.load %arg2[%c0_1, %c0_2] : memref<64x128xbf16, #tpu.memory_space<vmem>>, vector<64x128xbf16>
    %cst = arith.constant dense<0.000000e+00> : vector<8x128xf32>
    %2 = tpu.matmul %0, %1, %cst {dimension_numbers = #tpu.dot_dimension_numbers<[1], [0], [0], [1], [0, 0, 1, 1], [], []>} : vector<8x64xbf16>, vector<64x128xbf16>, vector<8x128xf32> -> vector<8x128xf32>
    %c0_3 = arith.constant 0 : index
    %c0_4 = arith.constant 0 : index
    %3 = vector.load %arg3[%c0_3, %c0_4] : memref<1x128xf32, #tpu.memory_space<vmem>>, vector<1x128xf32>
    %4 = vector.broadcast %3 : vector<1x128xf32> to vector<8x128xf32>
    %5 = arith.addf %2, %4 : vector<8x128xf32>
    %cst_5 = arith.constant 0.000000e+00 : f32
    %6 = vector.broadcast %cst_5 : f32 to vector<8x128xf32>
    %7 = arith.maximumf %5, %6 : vector<8x128xf32>
    %8 = arith.truncf %7 : vector<8x128xf32> to vector<8x128xbf16>
    %c0_6 = arith.constant 0 : index
    %c0_7 = arith.constant 0 : index
    %9 = vector.load %arg4[%c0_6, %c0_7] : memref<128x128xbf16, #tpu.memory_space<vmem>>, vector<128x128xbf16>
    %cst_8 = arith.constant dense<0.000000e+00> : vector<8x128xf32>
    %10 = tpu.matmul %8, %9, %cst_8 {dimension_numbers = #tpu.dot_dimension_numbers<[1], [0], [0], [1], [0, 0, 1, 1], [], []>} : vector<8x128xbf16>, vector<128x128xbf16>, vector<8x128xf32> -> vector<8x128xf32>
    %c0_9 = arith.constant 0 : index
    %c0_10 = arith.constant 0 : index
    %11 = vector.load %arg5[%c0_9, %c0_10] : memref<1x128xf32, #tpu.memory_space<vmem>>, vector<1x128xf32>
    %12 = vector.broadcast %11 : vector<1x128xf32> to vector<8x128xf32>
    %13 = arith.addf %10, %12 : vector<8x128xf32>
    %cst_11 = arith.constant 0.000000e+00 : f32
    %14 = vector.broadcast %cst_11 : f32 to vector<8x128xf32>
    %15 = arith.maximumf %13, %14 : vector<8x128xf32>
    %16 = arith.truncf %15 : vector<8x128xf32> to vector<8x128xbf16>
    %c0_12 = arith.constant 0 : index
    %c0_13 = arith.constant 0 : index
    %17 = vector.load %arg6[%c0_12, %c0_13] : memref<128x128xbf16, #tpu.memory_space<vmem>>, vector<128x128xbf16>
    %cst_14 = arith.constant dense<0.000000e+00> : vector<8x128xf32>
    %18 = tpu.matmul %16, %17, %cst_14 {dimension_numbers = #tpu.dot_dimension_numbers<[1], [0], [0], [1], [0, 0, 1, 1], [], []>} : vector<8x128xbf16>, vector<128x128xbf16>, vector<8x128xf32> -> vector<8x128xf32>
    %c0_15 = arith.constant 0 : index
    %c0_16 = arith.constant 0 : index
    %19 = vector.load %arg7[%c0_15, %c0_16] : memref<1x128xf32, #tpu.memory_space<vmem>>, vector<1x128xf32>
    %20 = vector.broadcast %19 : vector<1x128xf32> to vector<8x128xf32>
    %21 = arith.addf %18, %20 : vector<8x128xf32>
    %cst_17 = arith.constant dense<0xFF800000> : vector<8xf32>
    %22 = vector.multi_reduction <maximumf>, %21, %cst_17 [1] : vector<8x128xf32> to vector<8xf32>
    %23 = vector.shape_cast %22 : vector<8xf32> to vector<8x1xf32>
    %24 = vector.broadcast %23 : vector<8x1xf32> to vector<8x128xf32>
    %25 = arith.subf %21, %24 : vector<8x128xf32>
    %26 = math.exp %25 : vector<8x128xf32>
    %cst_18 = arith.constant dense<0.000000e+00> : vector<8xf32>
    %27 = vector.multi_reduction <add>, %26, %cst_18 [1] : vector<8x128xf32> to vector<8xf32>
    %28 = vector.shape_cast %27 : vector<8xf32> to vector<8x1xf32>
    %29 = vector.broadcast %28 : vector<8x1xf32> to vector<8x128xf32>
    %30 = arith.divf %26, %29 : vector<8x128xf32>
    %c0_19 = arith.constant 0 : index
    %c0_20 = arith.constant 0 : index
    %31 = vector.load %arg8[%c0_19, %c0_20] : memref<8x128xf32, #tpu.memory_space<vmem>>, vector<8x128xf32>
    tpu.vector_store %arg8[%c0_19, %c0_20], %30 {strides = array<i32>} : memref<8x128xf32, #tpu.memory_space<vmem>>, vector<8x128xf32>,
    return
  }
  func.func @transform_0(%arg0: i32) -> (i32, i32) {
    %c0_i32 = arith.constant 0 : i32
    %c0_i32_0 = arith.constant 0 : i32
    return %arg0, %c0_i32 : i32, i32
  }
  func.func @transform_1(%arg0: i32) -> (i32, i32) {
    %c0_i32 = arith.constant 0 : i32
    %c0_i32_0 = arith.constant 0 : i32
    %c0_i32_1 = arith.constant 0 : i32
    return %c0_i32, %c0_i32_0 : i32, i32
  }
  func.func @transform_2(%arg0: i32) -> (i32, i32) {
    %c0_i32 = arith.constant 0 : i32
    %c0_i32_0 = arith.constant 0 : i32
    %c0_i32_1 = arith.constant 0 : i32
    return %c0_i32, %c0_i32_0 : i32, i32
  }
  func.func @transform_3(%arg0: i32) -> (i32, i32) {
    %c0_i32 = arith.constant 0 : i32
    %c0_i32_0 = arith.constant 0 : i32
    %c0_i32_1 = arith.constant 0 : i32
    return %c0_i32, %c0_i32_0 : i32, i32
  }
  func.func @transform_4(%arg0: i32) -> (i32, i32) {
    %c0_i32 = arith.constant 0 : i32
    %c0_i32_0 = arith.constant 0 : i32
    %c0_i32_1 = arith.constant 0 : i32
    return %c0_i32, %c0_i32_0 : i32, i32
  }
  func.func @transform_5(%arg0: i32) -> (i32, i32) {
    %c0_i32 = arith.constant 0 : i32
    %c0_i32_0 = arith.constant 0 : i32
    %c0_i32_1 = arith.constant 0 : i32
    return %c0_i32, %c0_i32_0 : i32, i32
  }
  func.func @transform_6(%arg0: i32) -> (i32, i32) {
    %c0_i32 = arith.constant 0 : i32
    %c0_i32_0 = arith.constant 0 : i32
    %c0_i32_1 = arith.constant 0 : i32
    return %c0_i32, %c0_i32_0 : i32, i32
  }
  func.func @transform_7(%arg0: i32) -> (i32, i32) {
    %c0_i32 = arith.constant 0 : i32
    %c0_i32_0 = arith.constant 0 : i32
    return %arg0, %c0_i32 : i32, i32
  }
}

</mosaic_0001>

<llo_original>
// kernel: _actor_forward_padded.1
$region0: #{_actor_forward_padded.1}
  #allocation0 [shape = 'u32[]', space=smem, size = 0x4, offset = 0x4, fixed_abs, tag = 'smem constant byte address 0x4 - core index']
  #allocation1 [shape = 'u32[144,128]{1,0:T(1,128)}', space=vmem, size = 0x12000, scoped, tag = 'internal scratch']
  %s0 = inlined_call_operand.vmem [shape: bf16[8,64], index: 0, kind: input, shape index: {}]
  %s1 = inlined_call_operand.hbm [shape: bf16[64,128], index: 1, kind: input, shape index: {}]
  %s2 = inlined_call_operand.vmem [shape: f32[1,128], index: 2, kind: input, shape index: {}]
  %s3 = inlined_call_operand.hbm [shape: bf16[128,128], index: 3, kind: input, shape index: {}]
  %s4 = inlined_call_operand.vmem [shape: f32[1,128], index: 4, kind: input, shape index: {}]
  %s5 = inlined_call_operand.hbm [shape: bf16[128,128], index: 5, kind: input, shape index: {}]
  %s6 = inlined_call_operand.vmem [shape: f32[1,128], index: 6, kind: input, shape index: {}]
  %s7 = inlined_call_operand.hbm [shape: f32[8,128], index: 7, kind: output, shape index: {}]
  %s8 = sld [smem:[#allocation0]]
  $region50: #{_actor_forward_padded.1} parent=0
    _
  %s10 = ssub.s32 1, %s8
  %s11 = scalar_select 0, %s10, %s8
  $region1: #{_actor_forward_padded.1} parent=0
    #allocation2 [shape = 'u8[16384]{0}', space=vmem, size = 0x4000, scoped, tag = 'input window, operand 1, single buffered']
    #allocation3 [shape = 's32[1]{0}', space=sflag, size = 0x4, scoped, tag = 'scoped memory for _actor_forward_padded.1']
    #allocation4 [shape = 's32[1]{0}', space=sflag, size = 0x4, scoped, tag = 'scoped memory for _actor_forward_padded.1']
    #allocation5 [shape = 'u8[32768]{0}', space=vmem, size = 0x8000, scoped, tag = 'input window, operand 3, single buffered']
    #allocation6 [shape = 's32[1]{0}', space=sflag, size = 0x4, scoped, tag = 'scoped memory for _actor_forward_padded.1']
    #allocation7 [shape = 'u8[32768]{0}', space=vmem, size = 0x8000, scoped, tag = 'input window, operand 5, single buffered']
    #allocation8 [shape = 'u8[4096]{0}', space=vmem, size = 0x1000, scoped, tag = 'output window, operand 0, single buffered']
    %12 = vsyncpa [#allocation3], 0
    %13 = vsyncpa [#allocation6], 0
    %14 = vsyncpa [#allocation4], 0
    // Predicated region
    $region2: #{_actor_forward_padded.1} parent=1 // pred_check
      _
    $region3: #{_actor_forward_padded.1} parent=1 // pred_check_branch
      %16 = sbr.rel (0) target = $region5
    $region4: #{_actor_forward_padded.1} parent=1 // pred_region
      _
    $region5: #{_actor_forward_padded.1} parent=1 // pred_fallthru
      _
    // Predicated region
    $region6: #{_actor_forward_padded.1} parent=1 // pred_check
      _
    $region7: #{_actor_forward_padded.1} parent=1 // pred_check_branch
      %18 = sbr.rel (0) target = $region9
    $region8: #{_actor_forward_padded.1} parent=1 // pred_region
      %s20 = ssub.s32 512, 512
      %21 = vsyncadd [#allocation3], %s20
      %s22 = sshll.u32 [#allocation2], 4
      %s23 = int_to_ptr.vmem [resolvable:$true] %s22
      %28 = dma.hbm_to_vmem [thread:$0]  %s1, 512, %s23, [#allocation3], 64, 64, 4
    $region9: #{_actor_forward_padded.1} parent=1 // pred_fallthru
      _
    // Predicated region
    $region10: #{_actor_forward_padded.1} parent=1 // pred_check
      _
    $region11: #{_actor_forward_padded.1} parent=1 // pred_check_branch
      %30 = sbr.rel (0) target = $region13
    $region12: #{_actor_forward_padded.1} parent=1 // pred_region
      _
    $region13: #{_actor_forward_padded.1} parent=1 // pred_fallthru
      _
    // Predicated region
    $region14: #{_actor_forward_padded.1} parent=1 // pred_check
      _
    $region15: #{_actor_forward_padded.1} parent=1 // pred_check_branch
      %32 = sbr.rel (0) target = $region17
    $region16: #{_actor_forward_padded.1} parent=1 // pred_region
      %s34 = ssub.s32 1024, 1024
      %35 = vsyncadd [#allocation6], %s34
      %s36 = sshll.u32 [#allocation5], 4
      %s37 = int_to_ptr.vmem [resolvable:$true] %s36
      %42 = dma.hbm_to_vmem [thread:$0]  %s3, 1024, %s37, [#allocation6], 64, 64, 4
    $region17: #{_actor_forward_padded.1} parent=1 // pred_fallthru
      _
    // Predicated region
    $region18: #{_actor_forward_padded.1} parent=1 // pred_check
      _
    $region19: #{_actor_forward_padded.1} parent=1 // pred_check_branch
      %44 = sbr.rel (0) target = $region21
    $region20: #{_actor_forward_padded.1} parent=1 // pred_region
      _
    $region21: #{_actor_forward_padded.1} parent=1 // pred_fallthru
      _
    // Predicated region
    $region22: #{_actor_forward_padded.1} parent=1 // pred_check
      _
    $region23: #{_actor_forward_padded.1} parent=1 // pred_check_branch
      %46 = sbr.rel (0) target = $region25
    $region24: #{_actor_forward_padded.1} parent=1 // pred_region
      %s48 = ssub.s32 1024, 1024
      %49 = vsyncadd [#allocation6], %s48
      %s50 = sshll.u32 [#allocation7], 4
      %s51 = int_to_ptr.vmem [resolvable:$true] %s50
      %56 = dma.hbm_to_vmem [thread:$0]  %s5, 1024, %s51, [#allocation6], 64, 64, 4
    $region25: #{_actor_forward_padded.1} parent=1 // pred_fallthru
      _
    // Predicated region
    $region26: #{_actor_forward_padded.1} parent=1 // pred_check
      _
    $region27: #{_actor_forward_padded.1} parent=1 // pred_check_branch
      %58 = sbr.rel (0) target = $region29
    $region28: #{_actor_forward_padded.1} parent=1 // pred_region
      _
    $region29: #{_actor_forward_padded.1} parent=1 // pred_fallthru
      _
    // Predicated region
    $region30: #{_actor_forward_padded.1} parent=1 // pred_check
      _
    $region31: #{_actor_forward_padded.1} parent=1 // pred_check_branch
      %60 = sbr.rel (0) target = $region33
    $region32: #{_actor_forward_padded.1} parent=1 // pred_region
      %61 = dma.done [#allocation3], 512
    $region33: #{_actor_forward_padded.1} parent=1 // pred_fallthru
      _
    // Predicated region
    $region34: #{_actor_forward_padded.1} parent=1 // pred_check
      _
    $region35: #{_actor_forward_padded.1} parent=1 // pred_check_branch
      %63 = sbr.rel (0) target = $region37
    $region36: #{_actor_forward_padded.1} parent=1 // pred_region
      %64 = dma.done [#allocation6], 1024
    $region37: #{_actor_forward_padded.1} parent=1 // pred_fallthru
      _
    // Predicated region
    $region38: #{_actor_forward_padded.1} parent=1 // pred_check
      _
    $region39: #{_actor_forward_padded.1} parent=1 // pred_check_branch
      %66 = sbr.rel (0) target = $region41
    $region40: #{_actor_forward_padded.1} parent=1 // pred_region
      %67 = dma.done [#allocation6], 1024
    $region41: #{_actor_forward_padded.1} parent=1 // pred_fallthru
      _
    %v69 = vld [vmem:[%s0] sm:$0xf]
    %v70 = vld [vmem:[#allocation2] sm:$0xf]
    %v71 = vld [vmem:[#allocation2 + $0x4] sm:$0xf]
    %v72 = vld [vmem:[#allocation2 + $0x8] sm:$0xf]
    %v73 = vld [vmem:[#allocation2 + $0xc] sm:$0xf]
    %v74 = vld [vmem:[#allocation2 + $0x10] sm:$0xf]
    %v75 = vld [vmem:[#allocation2 + $0x14] sm:$0xf]
    %v76 = vld [vmem:[#allocation2 + $0x18] sm:$0xf]
    %v77 = vld [vmem:[#allocation2 + $0x1c] sm:$0xf]
    %v78 = vld [vmem:[%s2] sm:$0x1]
    %v80 = vlaneseq
    %v81 = vshrl.u32 %v80, 7
    %v82 = vsub.s32 0, %v81
    %v83 = vrot.slane %v78, %v82
    %v93 = vunpack.c.l.b16 %v70
    %v94 = vunpack.c.l.b16 %v71
    %v95 = vunpack.c.l.b16 %v72
    %v96 = vunpack.c.l.b16 %v73
    %v97 = vunpack.c.l.b16 %v74
    %v98 = vunpack.c.l.b16 %v75
    %v99 = vunpack.c.l.b16 %v76
    %v100 = vunpack.c.l.b16 %v77
    %v101 = vpack.c.b16 %v94, %v93
    %v102 = vpack.c.b16 %v96, %v95
    %v103 = vpack.c.b16 %v98, %v97
    %v104 = vpack.c.b16 %v100, %v99
    %vm109 = vcmask 523264
    %v111 = vsel %vm109, %v69, 0
    %113 = vmatprep.subr.bf16.mxu0 0
    %114 = vmatpush1.bf16.msra.mxu0 0
    %115 = vmatprep.subr.bf16.mxu0 0
    %116 = vmatpush1.bf16.msra.mxu0 0
    %117 = vmatprep.subr.bf16.mxu0 0
    %118 = vmatpush1.bf16.msra.mxu0 0
    %119 = vmatprep.subr.bf16.mxu0 0
    %120 = vmatpush1.bf16.msra.mxu0 0
    %121 = vmatprep.subr.bf16.mxu0 0
    %122 = vmatpush1.bf16.msra.mxu0 %v104
    %123 = vmatprep.subr.bf16.mxu0 0
    %124 = vmatpush1.bf16.msra.mxu0 %v103
    %125 = vmatprep.subr.bf16.mxu0 0
    %126 = vmatpush1.bf16.msra.mxu0 %v102
    %127 = vmatprep.subr.bf16.mxu0 0
    %128 = vmatpush1.bf16.msra.mxu0 %v101
    %129 = vmatprep.subr.bf16.mxu0 0
    %130 = vmatpush2.bf16.msra.mxu0 0
    %131 = vmatprep.subr.bf16.mxu0 0
    %132 = vmatpush2.bf16.msra.mxu0 0
    %133 = vmatprep.subr.bf16.mxu0 0
    %134 = vmatpush2.bf16.msra.mxu0 0
    %135 = vmatprep.subr.bf16.mxu0 0
    %136 = vmatpush2.bf16.msra.mxu0 0
    %137 = vmatprep.subr.bf16.mxu0 0
    %138 = vmatpush2.bf16.msra.mxu0 0
    %139 = vmatprep.subr.bf16.mxu0 0
    %140 = vmatpush2.bf16.msra.mxu0 0
    %141 = vmatprep.subr.bf16.mxu0 0
    %142 = vmatpush2.bf16.msra.mxu0 0
    %143 = vmatprep.subr.bf16.mxu0 0
    %144 = vmatpush2.bf16.msra.mxu0 0
    %145 = vmatprep.mubr.bf16.mxu0 0
    %146 = vmatmul.mubr.bf16.gmra.mxu0 %v111
    %v147 = vpop.f32.mrf.mxu0
    %v148 = vadd.f32 %v83, %v147
    %v149 = vpop.f32.mrf.mxu0
    %v150 = vpop.f32.mrf.mxu0
    %v151 = vpop.f32.mrf.mxu0
    %152 = vdwg.mxu0
    %v153 = vmax.f32 %v148, 0.0
    %v154 = vpack.c.bf16 %v153, %v153
    %v155 = vld [vmem:[#allocation5] sm:$0xf]
    %v156 = vld [vmem:[#allocation5 + $0x4] sm:$0xf]
    %v157 = vld [vmem:[#allocation5 + $0x8] sm:$0xf]
    %v158 = vld [vmem:[#allocation5 + $0xc] sm:$0xf]
    %v159 = vld [vmem:[#allocation5 + $0x10] sm:$0xf]
    %v160 = vld [vmem:[#allocation5 + $0x14] sm:$0xf]
    %v161 = vld [vmem:[#allocation5 + $0x18] sm:$0xf]
    %v162 = vld [vmem:[#allocation5 + $0x1c] sm:$0xf]
    %v163 = vld [vmem:[#allocation5 + $0x20] sm:$0xf]
    %v164 = vld [vmem:[#allocation5 + $0x24] sm:$0xf]
    %v165 = vld [vmem:[#allocation5 + $0x28] sm:$0xf]
    %v166 = vld [vmem:[#allocation5 + $0x2c] sm:$0xf]
    %v167 = vld [vmem:[#allocation5 + $0x30] sm:$0xf]
    %v168 = vld [vmem:[#allocation5 + $0x34] sm:$0xf]
    %v169 = vld [vmem:[#allocation5 + $0x38] sm:$0xf]
    %v170 = vld [vmem:[#allocation5 + $0x3c] sm:$0xf]
    %v171 = vld [vmem:[%s4] sm:$0x1]
    %v173 = vlaneseq
    %v174 = vshrl.u32 %v173, 7
    %v175 = vsub.s32 0, %v174
    %v176 = vrot.slane %v171, %v175
    %v194 = vunpack.c.l.b16 %v155
    %v195 = vunpack.c.l.b16 %v156
    %v196 = vunpack.c.l.b16 %v157
    %v197 = vunpack.c.l.b16 %v158
    %v198 = vunpack.c.l.b16 %v159
    %v199 = vunpack.c.l.b16 %v160
    %v200 = vunpack.c.l.b16 %v161
    %v201 = vunpack.c.l.b16 %v162
    %v202 = vunpack.c.l.b16 %v163
    %v203 = vunpack.c.l.b16 %v164
    %v204 = vunpack.c.l.b16 %v165
    %v205 = vunpack.c.l.b16 %v166
    %v206 = vunpack.c.l.b16 %v167
    %v207 = vunpack.c.l.b16 %v168
    %v208 = vunpack.c.l.b16 %v169
    %v209 = vunpack.c.l.b16 %v170
    %v210 = vpack.c.b16 %v195, %v194
    %v211 = vpack.c.b16 %v197, %v196
    %v212 = vpack.c.b16 %v199, %v198
    %v213 = vpack.c.b16 %v201, %v200
    %v214 = vpack.c.b16 %v203, %v202
    %v215 = vpack.c.b16 %v205, %v204
    %v216 = vpack.c.b16 %v207, %v206
    %v217 = vpack.c.b16 %v209, %v208
    %226 = vmatprep.subr.bf16.mxu0 0
    %227 = vmatpush1.bf16.msra.mxu0 %v217
    %228 = vmatprep.subr.bf16.mxu0 0
    %229 = vmatpush1.bf16.msra.mxu0 %v216
    %230 = vmatprep.subr.bf16.mxu0 0
    %231 = vmatpush1.bf16.msra.mxu0 %v215
    %232 = vmatprep.subr.bf16.mxu0 0
    %233 = vmatpush1.bf16.msra.mxu0 %v214
    %234 = vmatprep.subr.bf16.mxu0 0
    %235 = vmatpush1.bf16.msra.mxu0 %v213
    %236 = vmatprep.subr.bf16.mxu0 0
    %237 = vmatpush1.bf16.msra.mxu0 %v212
    %238 = vmatprep.subr.bf16.mxu0 0
    %239 = vmatpush1.bf16.msra.mxu0 %v211
    %240 = vmatprep.subr.bf16.mxu0 0
    %241 = vmatpush1.bf16.msra.mxu0 %v210
    %242 = vmatprep.subr.bf16.mxu0 0
    %243 = vmatpush2.bf16.msra.mxu0 0
    %244 = vmatprep.subr.bf16.mxu0 0
    %245 = vmatpush2.bf16.msra.mxu0 0
    %246 = vmatprep.subr.bf16.mxu0 0
    %247 = vmatpush2.bf16.msra.mxu0 0
    %248 = vmatprep.subr.bf16.mxu0 0
    %249 = vmatpush2.bf16.msra.mxu0 0
    %250 = vmatprep.subr.bf16.mxu0 0
    %251 = vmatpush2.bf16.msra.mxu0 0
    %252 = vmatprep.subr.bf16.mxu0 0
    %253 = vmatpush2.bf16.msra.mxu0 0
    %254 = vmatprep.subr.bf16.mxu0 0
    %255 = vmatpush2.bf16.msra.mxu0 0
    %256 = vmatprep.subr.bf16.mxu0 0
    %257 = vmatpush2.bf16.msra.mxu0 0
    %258 = vmatprep.mubr.bf16.mxu0 0
    %259 = vmatmul.mubr.bf16.gmra.mxu0 %v154
    %v260 = vpop.f32.mrf.mxu0
    %v261 = vadd.f32 %v176, %v260
    %v262 = vpop.f32.mrf.mxu0
    %v263 = vpop.f32.mrf.mxu0
    %v264 = vpop.f32.mrf.mxu0
    %265 = vdwg.mxu0
    %v266 = vmax.f32 %v261, 0.0
    %v267 = vpack.c.bf16 %v266, %v266
    %v268 = vld [vmem:[#allocation7] sm:$0xf]
    %v269 = vld [vmem:[#allocation7 + $0x4] sm:$0xf]
    %v270 = vld [vmem:[#allocation7 + $0x8] sm:$0xf]
    %v271 = vld [vmem:[#allocation7 + $0xc] sm:$0xf]
    %v272 = vld [vmem:[#allocation7 + $0x10] sm:$0xf]
    %v273 = vld [vmem:[#allocation7 + $0x14] sm:$0xf]
    %v274 = vld [vmem:[#allocation7 + $0x18] sm:$0xf]
    %v275 = vld [vmem:[#allocation7 + $0x1c] sm:$0xf]
    %v276 = vld [vmem:[#allocation7 + $0x20] sm:$0xf]
    %v277 = vld [vmem:[#allocation7 + $0x24] sm:$0xf]
    %v278 = vld [vmem:[#allocation7 + $0x28] sm:$0xf]
    %v279 = vld [vmem:[#allocation7 + $0x2c] sm:$0xf]
    %v280 = vld [vmem:[#allocation7 + $0x30] sm:$0xf]
    %v281 = vld [vmem:[#allocation7 + $0x34] sm:$0xf]
    %v282 = vld [vmem:[#allocation7 + $0x38] sm:$0xf]
    %v283 = vld [vmem:[#allocation7 + $0x3c] sm:$0xf]
    %v284 = vld [vmem:[%s6] sm:$0x1]
    %v286 = vlaneseq
    %v287 = vshrl.u32 %v286, 7
    %v288 = vsub.s32 0, %v287
    %v289 = vrot.slane %v284, %v288
    %v307 = vunpack.c.l.b16 %v268
    %v308 = vunpack.c.l.b16 %v269
    %v309 = vunpack.c.l.b16 %v270
    %v310 = vunpack.c.l.b16 %v271
    %v311 = vunpack.c.l.b16 %v272
    %v312 = vunpack.c.l.b16 %v273
    %v313 = vunpack.c.l.b16 %v274
    %v314 = vunpack.c.l.b16 %v275
    %v315 = vunpack.c.l.b16 %v276
    %v316 = vunpack.c.l.b16 %v277
    %v317 = vunpack.c.l.b16 %v278
    %v318 = vunpack.c.l.b16 %v279
    %v319 = vunpack.c.l.b16 %v280
    %v320 = vunpack.c.l.b16 %v281
    %v321 = vunpack.c.l.b16 %v282
    %v322 = vunpack.c.l.b16 %v283
    %v323 = vpack.c.b16 %v308, %v307
    %v324 = vpack.c.b16 %v310, %v309
    %v325 = vpack.c.b16 %v312, %v311
    %v326 = vpack.c.b16 %v314, %v313
    %v327 = vpack.c.b16 %v316, %v315
    %v328 = vpack.c.b16 %v318, %v317
    %v329 = vpack.c.b16 %v320, %v319
    %v330 = vpack.c.b16 %v322, %v321
    %339 = vmatprep.subr.bf16.mxu0 0
    %340 = vmatpush1.bf16.msra.mxu0 %v330
    %341 = vmatprep.subr.bf16.mxu0 0
    %342 = vmatpush1.bf16.msra.mxu0 %v329
    %343 = vmatprep.subr.bf16.mxu0 0
    %344 = vmatpush1.bf16.msra.mxu0 %v328
    %345 = vmatprep.subr.bf16.mxu0 0
    %346 = vmatpush1.bf16.msra.mxu0 %v327
    %347 = vmatprep.subr.bf16.mxu0 0
    %348 = vmatpush1.bf16.msra.mxu0 %v326
    %349 = vmatprep.subr.bf16.mxu0 0
    %350 = vmatpush1.bf16.msra.mxu0 %v325
    %351 = vmatprep.subr.bf16.mxu0 0
    %352 = vmatpush1.bf16.msra.mxu0 %v324
    %353 = vmatprep.subr.bf16.mxu0 0
    %354 = vmatpush1.bf16.msra.mxu0 %v323
    %355 = vmatprep.subr.bf16.mxu0 0
    %356 = vmatpush2.bf16.msra.mxu0 0
    %357 = vmatprep.subr.bf16.mxu0 0
    %358 = vmatpush2.bf16.msra.mxu0 0
    %359 = vmatprep.subr.bf16.mxu0 0
    %360 = vmatpush2.bf16.msra.mxu0 0
    %361 = vmatprep.subr.bf16.mxu0 0
    %362 = vmatpush2.bf16.msra.mxu0 0
    %363 = vmatprep.subr.bf16.mxu0 0
    %364 = vmatpush2.bf16.msra.mxu0 0
    %365 = vmatprep.subr.bf16.mxu0 0
    %366 = vmatpush2.bf16.msra.mxu0 0
    %367 = vmatprep.subr.bf16.mxu0 0
    %368 = vmatpush2.bf16.msra.mxu0 0
    %369 = vmatprep.subr.bf16.mxu0 0
    %370 = vmatpush2.bf16.msra.mxu0 0
    %371 = vmatprep.mubr.bf16.mxu0 0
    %372 = vmatmul.mubr.bf16.gmra.mxu0 %v267
    %v373 = vpop.f32.mrf.mxu0
    %v374 = vadd.f32 %v289, %v373
    %v375 = vpop.f32.mrf.mxu0
    %v376 = vpop.f32.mrf.mxu0
    %v377 = vpop.f32.mrf.mxu0
    %378 = vdwg.mxu0
    %379 = vmax.xlane.f32.xlu0 %v374
    %v380 = vpop.xlane.xlu0 %379
    %v381 = vsub.f32 %v374, %v380
    %v382 = vmul.f32 %v381, 1.442695
    %v383 = vpow.pop %v382
    %384 = vadd.xlane.f32.xlu0 %v383
    %v385 = vpop.xlane.xlu0 %384
    %v386 = vrcp.pop %v385
    %v387 = vmul.f32 %v383, %v386
    %388 = vst [vmem:[#allocation8] sm:$0xff] %v387
    // Predicated region
    $region42: #{_actor_forward_padded.1} parent=1 // pred_check
      _
    $region43: #{_actor_forward_padded.1} parent=1 // pred_check_branch
      %390 = sbr.rel (0) target = $region45
    $region44: #{_actor_forward_padded.1} parent=1 // pred_region
      %s392 = ssub.s32 128, 128
      %393 = vsyncadd [#allocation4], %s392
      %s395 = sshll.u32 [#allocation8], 4
      %s396 = int_to_ptr.vmem [resolvable:$true] %s395
      %398 = dma.vmem_to_hbm [thread:$0]  %s396, 128, %s7, [#allocation4]
    $region45: #{_actor_forward_padded.1} parent=1 // pred_fallthru
      _
    // Predicated region
    $region46: #{_actor_forward_padded.1} parent=1 // pred_check
      _
    $region47: #{_actor_forward_padded.1} parent=1 // pred_check_branch
      %400 = sbr.rel (0) target = $region49
    $region48: #{_actor_forward_padded.1} parent=1 // pred_region
      %401 = dma.done [#allocation4], 128
    $region49: #{_actor_forward_padded.1} parent=1 // pred_fallthru
      _
    %402 = vsyncpa [#allocation3], 1
    %403 = vsyncpa [#allocation6], 1
    %404 = vsyncpa [#allocation4], 1

</llo_original>
